<compile_context>
chip_gen: v7x
topology: tpu7x:2x2x1
jax: 0.10.0
libtpu: 0.0.40
codegen_flags: <defaults>
</compile_context>

<pallas_src>
import functools

import jax
import jax.numpy as jnp
from jax import lax
from jax.experimental import pallas as pl
from jax.experimental.pallas import tpu as pltpu


def _round_up(x, m):
    return ((x + m - 1) // m) * m


_ACTIVATIONS = {
    "tanh": jnp.tanh,
    "sigmoid": jax.nn.sigmoid,
    "relu": jax.nn.relu,
}


def _make_mlp_kernel(num_hidden_layers, activation="tanh", tanh_bf16=False):
    """Kernel for the MLP in batch-last ([features, TM]) layout.

    Signature (L = num_hidden_layers > 0):
      kernel(x[2,TM], w_in[H,2], b_in[H,1], w_h[L,H,H], b_h[L,H,1],
             w_out_t[H,1], b_out[1,1], out[1,TM])
    For L == 0 the stacked hidden params are omitted.
    The activation follows every Linear except the last (torch Sequential).
    """
    base_act = _ACTIVATIONS[activation]
    if tanh_bf16:
        # v6e/v7x only: EUP runs bf16 ~2x; keep matmul inputs/accum in f32.
        def act(z):
            return base_act(z.astype(jnp.bfloat16)).astype(jnp.float32)
    else:
        act = base_act

    def kernel(x_ref, w_in_ref, b_in_ref, *rest):
        if num_hidden_layers > 0:
            wh_ref, bh_ref, w_out_ref, b_out_ref, out_ref = rest
        else:
            w_out_ref, b_out_ref, out_ref = rest

        x = x_ref[...]                       # [2, TM]
        w_in = w_in_ref[...]                 # [H, 2]

        # Input layer (K=2): two VPU broadcast-FMAs (avoids a degenerate MXU
        # matmul that would use only 2 of 128/256 weight rows).
        pre = (w_in[:, 0:1] * x[0:1, :]
               + w_in[:, 1:2] * x[1:2, :]
               + b_in_ref[...])              # [H, TM]
        h = act(pre)

        # Hidden layers: [H, H] @ [H, TM] -> [H, TM] on the MXU.
        if num_hidden_layers > 0:
            def layer(l, hh):
                z = jnp.dot(wh_ref[l], hh,
                            preferred_element_type=jnp.float32) + bh_ref[l]
                return act(z)

            if num_hidden_layers <= 4:
                for l in range(num_hidden_layers):   # static unroll (shallow)
                    h = layer(l, h)
            else:
                h = lax.fori_loop(0, num_hidden_layers, layer, h)

        # Output layer (M=1): broadcast multiply + sublane (XLU) reduction
        # instead of a one-row MXU matmul.  w_out is passed pre-shaped [H, 1].
        out = (jnp.sum(w_out_ref[...] * h, axis=0, keepdims=True)
               + b_out_ref[...])             # [1, TM], lane-dense
        out_ref[...] = out.astype(out_ref.dtype)

    return kernel


def init_pinn_params(key, num_hidden_nodes, num_layers, dtype=jnp.float32):
    """Xavier-normal weights (torch [out, in] layout), zero biases."""
    H = num_hidden_nodes
    k_in, k_hid, k_out = jax.random.split(key, 3)

    std_in = (2.0 / (2 + H)) ** 0.5
    w_in = std_in * jax.random.normal(k_in, (H, 2), dtype=dtype)
    b_in = jnp.zeros((H, 1), dtype=dtype)

    std_h = (2.0 / (H + H)) ** 0.5
    w_hidden = std_h * jax.random.normal(k_hid, (num_layers, H, H), dtype=dtype)
    b_hidden = jnp.zeros((num_layers, H, 1), dtype=dtype)

    std_out = (2.0 / (H + 1)) ** 0.5
    w_out = std_out * jax.random.normal(k_out, (1, H), dtype=dtype)
    b_out = jnp.zeros((1, 1), dtype=dtype)

    return w_in, b_in, w_hidden, b_hidden, w_out, b_out


@functools.partial(jax.jit, static_argnames=("tm", "activation", "tanh_bf16"))
def pinn_forward(x, w_in, b_in, w_hidden, b_hidden, w_out, b_out, *,
                 tm=4096, activation="tanh", tanh_bf16=False):
    """Forward pass of the PINN MLP.  x: [N, 2] -> [N, 1]."""
    n = x.shape[0]
    hdim = w_in.shape[0]
    num_hidden = w_hidden.shape[0]

    # --- Adaptive batch tiling --------------------------------------------
    # Minimize padded-column waste (kernel is tanh/EUP bound) and, when there
    # is enough work, guarantee >= 2 grid steps so v7x's second TC isn't idle.
    n_steps = max(1, pl.cdiv(n, max(tm, 128)))
    if n > 128:
        n_steps = max(n_steps, 2)
    tile = _round_up(pl.cdiv(n, n_steps), 128)
    padded = _round_up(n, tile)
    grid = (padded // tile,)

    # Batch-last layout: [2, padded] with zero padding on the ragged edge.
    # TODO(synk): generate collocation points in [2, N] layout upstream to
    # skip this extra transpose+pad pass over HBM.
    x_t = jnp.pad(x.T, ((0, 0), (0, padded - n)))

    # Output weight pre-shaped to [H, 1] so the in-kernel output reduction
    # needs no transpose.
    w_out_t = w_out.reshape(hdim, 1)

    kernel = _make_mlp_kernel(num_hidden, activation=activation,
                              tanh_bf16=tanh_bf16)

    # --- Parameter residency / VMEM budget ---------------------------------
    param_bytes = 4 * (w_in.size + b_in.size + w_hidden.size + b_hidden.size
                       + w_out.size + b_out.size)
    # Pallas double-buffers every BlockSpec by default; the parameters are
    # DMA'd once (constant index_map), so single-buffer them when the doubled
    # footprint starts to matter (large H / deep nets, esp. v7x 64 MiB VMEM).
    single_buffer_params = (2 * param_bytes) > (8 << 20)

    def param_spec(shape):
        index_map = lambda i: (0,) * len(shape)
        if single_buffer_params:
            return pl.BlockSpec(shape, index_map, pipeline_mode=pl.Buffered(1))
        return pl.BlockSpec(shape, index_map)

    args = [x_t, w_in, b_in]
    in_specs = [
        pl.BlockSpec((2, tile), lambda i: (0, i)),    # streamed input tiles
        param_spec((hdim, 2)),
        param_spec((hdim, 1)),
    ]
    if num_hidden > 0:
        args += [w_hidden, b_hidden]
        in_specs += [
            param_spec((num_hidden, hdim, hdim)),
            param_spec((num_hidden, hdim, 1)),
        ]
    args += [w_out_t, b_out]
    in_specs += [
        param_spec((hdim, 1)),
        param_spec((1, 1)),
    ]

    param_buf = (1 if single_buffer_params else 2) * param_bytes
    io_buf = 2 * 4 * (2 * tile) + 2 * 4 * tile        # x / out, double-buffered
    live_buf = 4 * 4 * hdim * tile                    # a few [H, tile] f32 temps
    vmem_limit = int(min(max(param_buf + io_buf + live_buf + (4 << 20),
                             32 << 20),
                         112 << 20))

    flops = 2 * padded * (2 * hdim + num_hidden * hdim * hdim + hdim)
    transcendentals = padded * (num_hidden + 1) * hdim
    bytes_accessed = 4 * (padded * 2 + padded) + int(param_bytes)

    out = pl.pallas_call(
        kernel,
        out_shape=jax.ShapeDtypeStruct((1, padded), x.dtype),
        grid=grid,
        in_specs=in_specs,
        out_specs=pl.BlockSpec((1, tile), lambda i: (0, i)),
        compiler_params=pltpu.CompilerParams(
            dimension_semantics=("parallel",),
            vmem_limit_bytes=vmem_limit),
        cost_estimate=pl.CostEstimate(
            flops=int(flops),
            transcendentals=int(transcendentals),
            bytes_accessed=int(bytes_accessed)),
    )(*args)

    # [1, padded] lane-dense slab -> [N, 1] (contiguous reshape + slice).
    return out.reshape(padded, 1)[:n]


def pinn_forward_ref(x, w_in, b_in, w_hidden, b_hidden, w_out, b_out,
                     activation="tanh"):
    """Pure-JAX reference (batch-first, torch-layout weights)."""
    act = _ACTIVATIONS[activation]
    h = act(x @ w_in.T + b_in.T)
    for l in range(w_hidden.shape[0]):
        h = act(h @ w_hidden[l].T + b_hidden[l].T)
    return h @ w_out.T + b_out.T


if __name__ == "__main__":
    num_hidden_nodes = 32
    num_layers = 2          # number of hidden->hidden Linear layers
    batch = 8

    key = jax.random.PRNGKey(0)
    pkey, xkey = jax.random.split(key)

    params = init_pinn_params(pkey, num_hidden_nodes, num_layers)
    # X = hstack((x, t)) -> shape [batch, 2], values in [0, 1]
    x = jax.random.uniform(xkey, (batch, 2), dtype=jnp.float32)

    out = pinn_forward(x, *params)
    out = jax.block_until_ready(out)

    ref = pinn_forward_ref(x, *params)
    assert out.shape == (batch, 1), out.shape
    assert jnp.allclose(out, ref, atol=1e-5, rtol=1e-5), (out, ref)

    print("KERNEL_OK")
</pallas_src>

<mosaic_0001>
module attributes {stable_mosaic.version = 11 : i64} {
  func.func @kernel(%arg0: i32, %arg1: memref<2x128xf32, #tpu.memory_space<vmem>>, %arg2: memref<32x2xf32, #tpu.memory_space<vmem>>, %arg3: memref<32x1xf32, #tpu.memory_space<vmem>>, %arg4: memref<2x32x32xf32, #tpu.memory_space<vmem>>, %arg5: memref<2x32x1xf32, #tpu.memory_space<vmem>>, %arg6: memref<32x1xf32, #tpu.memory_space<vmem>>, %arg7: memref<1x1xf32, #tpu.memory_space<vmem>>, %arg8: memref<1x128xf32, #tpu.memory_space<vmem>>) attributes {dimension_semantics = [#tpu.dimension_semantics<parallel>], iteration_bounds = array<i64: 1>, scalar_prefetch = 0 : i64, scratch_operands = 0 : i64, tpu.core_type = #tpu.core_type<tc>, window_params = [{transform_indices = @transform_0, window_bounds = array<i64: 2, 128>}, {pipeline_mode = #tpu.pipeline_mode<synchronous>, transform_indices = @transform_1, window_bounds = array<i64: 32, 2>}, {pipeline_mode = #tpu.pipeline_mode<synchronous>, transform_indices = @transform_2, window_bounds = array<i64: 32, 1>}, {pipeline_mode = #tpu.pipeline_mode<synchronous>, transform_indices = @transform_3, window_bounds = array<i64: 2, 32, 32>}, {pipeline_mode = #tpu.pipeline_mode<synchronous>, transform_indices = @transform_4, window_bounds = array<i64: 2, 32, 1>}, {pipeline_mode = #tpu.pipeline_mode<synchronous>, transform_indices = @transform_5, window_bounds = array<i64: 32, 1>}, {pipeline_mode = #tpu.pipeline_mode<synchronous>, transform_indices = @transform_6, window_bounds = array<i64: 1, 1>}, {transform_indices = @transform_7, window_bounds = array<i64: 1, 128>}]} {
    %c0 = arith.constant 0 : index
    %c0_0 = arith.constant 0 : index
    %0 = vector.load %arg1[%c0, %c0_0] : memref<2x128xf32, #tpu.memory_space<vmem>>, vector<2x128xf32>
    %c0_1 = arith.constant 0 : index
    %c0_2 = arith.constant 0 : index
    %1 = vector.load %arg2[%c0_1, %c0_2] : memref<32x2xf32, #tpu.memory_space<vmem>>, vector<32x2xf32>
    %2 = vector.extract_strided_slice %1 {offsets = [0, 0], sizes = [32, 1], strides = [1, 1]} : vector<32x2xf32> to vector<32x1xf32>
    %3 = vector.extract_strided_slice %0 {offsets = [0, 0], sizes = [1, 128], strides = [1, 1]} : vector<2x128xf32> to vector<1x128xf32>
    %4 = vector.broadcast %2 : vector<32x1xf32> to vector<32x128xf32>
    %5 = vector.broadcast %3 : vector<1x128xf32> to vector<32x128xf32>
    %6 = arith.mulf %4, %5 : vector<32x128xf32>
    %7 = vector.extract_strided_slice %1 {offsets = [0, 1], sizes = [32, 1], strides = [1, 1]} : vector<32x2xf32> to vector<32x1xf32>
    %8 = vector.extract_strided_slice %0 {offsets = [1, 0], sizes = [1, 128], strides = [1, 1]} : vector<2x128xf32> to vector<1x128xf32>
    %9 = vector.broadcast %7 : vector<32x1xf32> to vector<32x128xf32>
    %10 = vector.broadcast %8 : vector<1x128xf32> to vector<32x128xf32>
    %11 = arith.mulf %9, %10 : vector<32x128xf32>
    %12 = arith.addf %6, %11 : vector<32x128xf32>
    %c0_3 = arith.constant 0 : index
    %c0_4 = arith.constant 0 : index
    %13 = vector.load %arg3[%c0_3, %c0_4] : memref<32x1xf32, #tpu.memory_space<vmem>>, vector<32x1xf32>
    %14 = vector.broadcast %13 : vector<32x1xf32> to vector<32x128xf32>
    %15 = arith.addf %12, %14 : vector<32x128xf32>
    %16 = math.tanh %15 : vector<32x128xf32>
    %c0_5 = arith.constant 0 : index
    %c0_6 = arith.constant 0 : index
    %c0_7 = arith.constant 0 : index
    %17 = vector.load %arg4[%c0_5, %c0_6, %c0_7] : memref<2x32x32xf32, #tpu.memory_space<vmem>>, vector<1x32x32xf32>
    %18 = vector.shape_cast %17 : vector<1x32x32xf32> to vector<32x32xf32>
    %cst = arith.constant dense<0.000000e+00> : vector<32x128xf32>
    %19 = tpu.matmul %18, %16, %cst {dimension_numbers = #tpu.dot_dimension_numbers<[1], [0], [0], [1], [0, 0, 1, 1], [], []>} : vector<32x32xf32>, vector<32x128xf32>, vector<32x128xf32> -> vector<32x128xf32>
    %c0_8 = arith.constant 0 : index
    %c0_9 = arith.constant 0 : index
    %c0_10 = arith.constant 0 : index
    %20 = vector.load %arg5[%c0_8, %c0_9, %c0_10] : memref<2x32x1xf32, #tpu.memory_space<vmem>>, vector<1x32x1xf32>
    %21 = vector.shape_cast %20 : vector<1x32x1xf32> to vector<32x1xf32>
    %22 = vector.broadcast %21 : vector<32x1xf32> to vector<32x128xf32>
    %23 = arith.addf %19, %22 : vector<32x128xf32>
    %24 = math.tanh %23 : vector<32x128xf32>
    %c1 = arith.constant 1 : index
    %c0_11 = arith.constant 0 : index
    %c0_12 = arith.constant 0 : index
    %25 = vector.load %arg4[%c1, %c0_11, %c0_12] : memref<2x32x32xf32, #tpu.memory_space<vmem>>, vector<1x32x32xf32>
    %26 = vector.shape_cast %25 : vector<1x32x32xf32> to vector<32x32xf32>
    %cst_13 = arith.constant dense<0.000000e+00> : vector<32x128xf32>
    %27 = tpu.matmul %26, %24, %cst_13 {dimension_numbers = #tpu.dot_dimension_numbers<[1], [0], [0], [1], [0, 0, 1, 1], [], []>} : vector<32x32xf32>, vector<32x128xf32>, vector<32x128xf32> -> vector<32x128xf32>
    %c1_14 = arith.constant 1 : index
    %c0_15 = arith.constant 0 : index
    %c0_16 = arith.constant 0 : index
    %28 = vector.load %arg5[%c1_14, %c0_15, %c0_16] : memref<2x32x1xf32, #tpu.memory_space<vmem>>, vector<1x32x1xf32>
    %29 = vector.shape_cast %28 : vector<1x32x1xf32> to vector<32x1xf32>
    %30 = vector.broadcast %29 : vector<32x1xf32> to vector<32x128xf32>
    %31 = arith.addf %27, %30 : vector<32x128xf32>
    %32 = math.tanh %31 : vector<32x128xf32>
    %c0_17 = arith.constant 0 : index
    %c0_18 = arith.constant 0 : index
    %33 = vector.load %arg6[%c0_17, %c0_18] : memref<32x1xf32, #tpu.memory_space<vmem>>, vector<32x1xf32>
    %34 = vector.broadcast %33 : vector<32x1xf32> to vector<32x128xf32>
    %35 = arith.mulf %34, %32 : vector<32x128xf32>
    %cst_19 = arith.constant dense<0.000000e+00> : vector<128xf32>
    %36 = vector.multi_reduction <add>, %35, %cst_19 [0] : vector<32x128xf32> to vector<128xf32>
    %37 = vector.shape_cast %36 : vector<128xf32> to vector<1x128xf32>
    %c0_20 = arith.constant 0 : index
    %c0_21 = arith.constant 0 : index
    %38 = vector.load %arg7[%c0_20, %c0_21] : memref<1x1xf32, #tpu.memory_space<vmem>>, vector<1x1xf32>
    %39 = vector.broadcast %38 : vector<1x1xf32> to vector<1x128xf32>
    %40 = arith.addf %37, %39 : vector<1x128xf32>
    %c0_22 = arith.constant 0 : index
    %c0_23 = arith.constant 0 : index
    %41 = vector.load %arg8[%c0_22, %c0_23] : memref<1x128xf32, #tpu.memory_space<vmem>>, vector<1x128xf32>
    tpu.vector_store %arg8[%c0_22, %c0_23], %40 {strides = array<i32>} : memref<1x128xf32, #tpu.memory_space<vmem>>, vector<1x128xf32>,
    return
  }
  func.func @transform_0(%arg0: i32) -> (i32, i32) {
    %c0_i32 = arith.constant 0 : i32
    %c0_i32_0 = arith.constant 0 : i32
    return %c0_i32, %arg0 : i32, i32
  }
  func.func @transform_1(%arg0: i32) -> (i32, i32) {
    %c0_i32 = arith.constant 0 : i32
    %c0_i32_0 = arith.constant 0 : i32
    %c0_i32_1 = arith.constant 0 : i32
    return %c0_i32, %c0_i32_0 : i32, i32
  }
  func.func @transform_2(%arg0: i32) -> (i32, i32) {
    %c0_i32 = arith.constant 0 : i32
    %c0_i32_0 = arith.constant 0 : i32
    %c0_i32_1 = arith.constant 0 : i32
    return %c0_i32, %c0_i32_0 : i32, i32
  }
  func.func @transform_3(%arg0: i32) -> (i32, i32, i32) {
    %c0_i32 = arith.constant 0 : i32
    %c0_i32_0 = arith.constant 0 : i32
    %c0_i32_1 = arith.constant 0 : i32
    %c0_i32_2 = arith.constant 0 : i32
    return %c0_i32, %c0_i32_0, %c0_i32_1 : i32, i32, i32
  }
  func.func @transform_4(%arg0: i32) -> (i32, i32, i32) {
    %c0_i32 = arith.constant 0 : i32
    %c0_i32_0 = arith.constant 0 : i32
    %c0_i32_1 = arith.constant 0 : i32
    %c0_i32_2 = arith.constant 0 : i32
    return %c0_i32, %c0_i32_0, %c0_i32_1 : i32, i32, i32
  }
  func.func @transform_5(%arg0: i32) -> (i32, i32) {
    %c0_i32 = arith.constant 0 : i32
    %c0_i32_0 = arith.constant 0 : i32
    %c0_i32_1 = arith.constant 0 : i32
    return %c0_i32, %c0_i32_0 : i32, i32
  }
  func.func @transform_6(%arg0: i32) -> (i32, i32) {
    %c0_i32 = arith.constant 0 : i32
    %c0_i32_0 = arith.constant 0 : i32
    %c0_i32_1 = arith.constant 0 : i32
    return %c0_i32, %c0_i32_0 : i32, i32
  }
  func.func @transform_7(%arg0: i32) -> (i32, i32) {
    %c0_i32 = arith.constant 0 : i32
    %c0_i32_0 = arith.constant 0 : i32
    return %c0_i32, %arg0 : i32, i32
  }
}

</mosaic_0001>

<llo_original>
// kernel: pinn_forward.1
$region0: #{pinn_forward.1}
  #allocation0 [shape = 'u32[]', space=smem, size = 0x4, offset = 0x4, fixed_abs, tag = 'smem constant byte address 0x4 - core index']
  #allocation1 [shape = 'u32[144,128]{1,0:T(1,128)}', space=vmem, size = 0x12000, scoped, tag = 'internal scratch']
  #allocation2 [shape = 'f32[1,1]{1,0:T(1,128)S(1)}', space=vmem, size = 0x200, scoped, tag = 'scoped memory for pinn_forward.1']
  %s0 = inlined_call_operand.vmem [shape: f32[2,128], index: 0, kind: input, shape index: {}]
  %s1 = inlined_call_operand.vmem [shape: f32[32,2], index: 1, kind: input, shape index: {}]
  %s2 = inlined_call_operand.vmem [shape: f32[32,1], index: 2, kind: input, shape index: {}]
  %s3 = inlined_call_operand.vmem [shape: f32[2,32,32], index: 3, kind: input, shape index: {}]
  %s4 = inlined_call_operand.vmem [shape: f32[2,32,1], index: 4, kind: input, shape index: {}]
  %s5 = inlined_call_operand.vmem [shape: f32[32,1], index: 5, kind: input, shape index: {}]
  %s6 = inlined_call_operand.<no memory space> [shape: f32[1,1], index: 6, kind: input, shape index: {}]
  %s7 = inlined_call_operand.vmem [shape: f32[1,128], index: 7, kind: output, shape index: {}]
  %s8 = sld [smem:[#allocation0]]
  $region38: #{pinn_forward.1} parent=0
    _
  %s10 = ssub.s32 1, %s8
  %s11 = scalar_select 0, %s10, %s8
  %v12 = vstv %s6
  %13 = vst [vmem:[#allocation2] sm:$0x1] %v12
  // Predicated region
  $region2: #{pinn_forward.1} parent=0 // pred_check
    _
  $region3: #{pinn_forward.1} parent=0 // pred_check_branch
    %15 = sbr.rel (0) target = $region5
  $region4: #{pinn_forward.1} parent=0 // pred_region
    _
  $region5: #{pinn_forward.1} parent=0 // pred_fallthru
    _
  // Predicated region
  $region6: #{pinn_forward.1} parent=0 // pred_check
    _
  $region7: #{pinn_forward.1} parent=0 // pred_check_branch
    %17 = sbr.rel (0) target = $region9
  $region8: #{pinn_forward.1} parent=0 // pred_region
    _
  $region9: #{pinn_forward.1} parent=0 // pred_fallthru
    _
  // Predicated region
  $region10: #{pinn_forward.1} parent=0 // pred_check
    _
  $region11: #{pinn_forward.1} parent=0 // pred_check_branch
    %19 = sbr.rel (0) target = $region13
  $region12: #{pinn_forward.1} parent=0 // pred_region
    _
  $region13: #{pinn_forward.1} parent=0 // pred_fallthru
    _
  // Predicated region
  $region14: #{pinn_forward.1} parent=0 // pred_check
    _
  $region15: #{pinn_forward.1} parent=0 // pred_check_branch
    %21 = sbr.rel (0) target = $region17
  $region16: #{pinn_forward.1} parent=0 // pred_region
    _
  $region17: #{pinn_forward.1} parent=0 // pred_fallthru
    _
  // Predicated region
  $region18: #{pinn_forward.1} parent=0 // pred_check
    _
  $region19: #{pinn_forward.1} parent=0 // pred_check_branch
    %23 = sbr.rel (0) target = $region21
  $region20: #{pinn_forward.1} parent=0 // pred_region
    _
  $region21: #{pinn_forward.1} parent=0 // pred_fallthru
    _
  // Predicated region
  $region22: #{pinn_forward.1} parent=0 // pred_check
    _
  $region23: #{pinn_forward.1} parent=0 // pred_check_branch
    %25 = sbr.rel (0) target = $region25
  $region24: #{pinn_forward.1} parent=0 // pred_region
    _
  $region25: #{pinn_forward.1} parent=0 // pred_fallthru
    _
  // Predicated region
  $region26: #{pinn_forward.1} parent=0 // pred_check
    _
  $region27: #{pinn_forward.1} parent=0 // pred_check_branch
    %27 = sbr.rel (0) target = $region29
  $region28: #{pinn_forward.1} parent=0 // pred_region
    _
  $region29: #{pinn_forward.1} parent=0 // pred_fallthru
    _
  %v28 = vld [vmem:[%s0] sm:$0x3]
  %v29 = vld [vmem:[%s1] sm:$0xff]
  %v30 = vld [vmem:[%s1 + $0x8] sm:$0xff]
  %v31 = vld [vmem:[%s1 + $0x10] sm:$0xff]
  %v32 = vld [vmem:[%s1 + $0x18] sm:$0xff]
  %34 = vset.pattern.permute.xlu0 0
  %35 = vperm.xlu0 %34, %v29
  %v36 = vpop.permute.xlu0 %35
  %39 = vset.pattern.permute.xlu0 0
  %40 = vperm.xlu0 %39, %v30
  %v41 = vpop.permute.xlu0 %40
  %44 = vset.pattern.permute.xlu0 0
  %45 = vperm.xlu0 %44, %v31
  %v46 = vpop.permute.xlu0 %45
  %49 = vset.pattern.permute.xlu0 0
  %50 = vperm.xlu0 %49, %v32
  %v51 = vpop.permute.xlu0 %50
  %v53 = vlaneseq
  %v54 = vshrl.u32 %v53, 7
  %v55 = vsub.s32 0, %v54
  %v56 = vrot.slane %v28, %v55
  %v57 = vmul.f32 %v36, %v56
  %v58 = vmul.f32 %v41, %v56
  %v59 = vmul.f32 %v46, %v56
  %v60 = vmul.f32 %v51, %v56
  %61 = vset.pattern.permute.xlu0 1
  %62 = vperm.xlu0 %61, %v29
  %v63 = vpop.permute.xlu0 %62
  %65 = vset.pattern.permute.xlu0 1
  %66 = vperm.xlu0 %65, %v30
  %v67 = vpop.permute.xlu0 %66
  %69 = vset.pattern.permute.xlu0 1
  %70 = vperm.xlu0 %69, %v31
  %v71 = vpop.permute.xlu0 %70
  %73 = vset.pattern.permute.xlu0 1
  %74 = vperm.xlu0 %73, %v32
  %v75 = vpop.permute.xlu0 %74
  %v77 = vlaneseq
  %v78 = vshrl.u32 %v77, 7
  %v79 = vsub.s32 1, %v78
  %v80 = vrot.slane %v28, %v79
  %v81 = vmul.f32 %v63, %v80
  %v82 = vmul.f32 %v67, %v80
  %v83 = vmul.f32 %v71, %v80
  %v84 = vmul.f32 %v75, %v80
  %v85 = vadd.f32 %v57, %v81
  %v86 = vadd.f32 %v58, %v82
  %v87 = vadd.f32 %v59, %v83
  %v88 = vadd.f32 %v60, %v84
  %v89 = vld [vmem:[%s2] sm:$0xff]
  %v90 = vld [vmem:[%s2 + $0x8] sm:$0xff]
  %v91 = vld [vmem:[%s2 + $0x10] sm:$0xff]
  %v92 = vld [vmem:[%s2 + $0x18] sm:$0xff]
  %94 = vset.pattern.permute.xlu0 0
  %95 = vperm.xlu0 %94, %v89
  %v96 = vpop.permute.xlu0 %95
  %99 = vset.pattern.permute.xlu0 0
  %100 = vperm.xlu0 %99, %v90
  %v101 = vpop.permute.xlu0 %100
  %104 = vset.pattern.permute.xlu0 0
  %105 = vperm.xlu0 %104, %v91
  %v106 = vpop.permute.xlu0 %105
  %109 = vset.pattern.permute.xlu0 0
  %110 = vperm.xlu0 %109, %v92
  %v111 = vpop.permute.xlu0 %110
  %v113 = vadd.f32 %v85, %v96
  %v114 = vadd.f32 %v86, %v101
  %v115 = vadd.f32 %v87, %v106
  %v116 = vadd.f32 %v88, %v111
  %v117 = vtanh.pop %v113
  %v118 = vtanh.pop %v114
  %v119 = vtanh.pop %v115
  %v120 = vtanh.pop %v116
  %v121 = vld [vmem:[%s3] sm:$0xff]
  %v122 = vld [vmem:[%s3 + $0x8] sm:$0xff]
  %v123 = vld [vmem:[%s3 + $0x10] sm:$0xff]
  %v124 = vld [vmem:[%s3 + $0x18] sm:$0xff]
  %v125 = vld [vmem:[%s4] sm:$0xff]
  %v126 = vld [vmem:[%s4 + $0x8] sm:$0xff]
  %v127 = vld [vmem:[%s4 + $0x10] sm:$0xff]
  %v128 = vld [vmem:[%s4 + $0x18] sm:$0xff]
  %130 = vset.pattern.permute.xlu0 0
  %131 = vperm.xlu0 %130, %v125
  %v132 = vpop.permute.xlu0 %131
  %135 = vset.pattern.permute.xlu0 0
  %136 = vperm.xlu0 %135, %v126
  %v137 = vpop.permute.xlu0 %136
  %140 = vset.pattern.permute.xlu0 0
  %141 = vperm.xlu0 %140, %v127
  %v142 = vpop.permute.xlu0 %141
  %145 = vset.pattern.permute.xlu0 0
  %146 = vperm.xlu0 %145, %v128
  %v147 = vpop.permute.xlu0 %146
  %vm149 = vcmask 261120
  %v151 = vsel %vm149, %v121, 0
  %v154 = vsel %vm149, %v122, 0
  %v157 = vsel %vm149, %v123, 0
  %v160 = vsel %vm149, %v124, 0
  %162 = vmatprep.subr.mxu0 0.0
  %163 = vmatpush1.msra.mxu0 %v117
  %164 = vmatprep.subr.mxu0 0.0
  %165 = vmatpush1.msra.mxu0 %v118
  %166 = vmatprep.subr.mxu0 0.0
  %167 = vmatpush1.msra.mxu0 %v119
  %168 = vmatprep.subr.mxu0 0.0
  %169 = vmatpush1.msra.mxu0 %v120
  %170 = vmatprep.subr.mxu0 0.0
  %171 = vmatpush1.msra.mxu0 0.0
  %172 = vmatprep.subr.mxu0 0.0
  %173 = vmatpush1.msra.mxu0 0.0
  %174 = vmatprep.subr.mxu0 0.0
  %175 = vmatpush1.msra.mxu0 0.0
  %176 = vmatprep.subr.mxu0 0.0
  %177 = vmatpush1.msra.mxu0 0.0
  %178 = vmatprep.subr.mxu0 0.0
  %179 = vmatpush1.msra.mxu0 0.0
  %180 = vmatprep.subr.mxu0 0.0
  %181 = vmatpush1.msra.mxu0 0.0
  %182 = vmatprep.subr.mxu0 0.0
  %183 = vmatpush1.msra.mxu0 0.0
  %184 = vmatprep.subr.mxu0 0.0
  %185 = vmatpush1.msra.mxu0 0.0
  %186 = vmatprep.subr.mxu0 0.0
  %187 = vmatpush1.msra.mxu0 0.0
  %188 = vmatprep.subr.mxu0 0.0
  %189 = vmatpush1.msra.mxu0 0.0
  %190 = vmatprep.subr.mxu0 0.0
  %191 = vmatpush1.msra.mxu0 0.0
  %192 = vmatprep.subr.mxu0 0.0
  %193 = vmatpush1.msra.mxu0 0.0
  %194 = vmatprep.subr.mxu0 0.0
  %195 = vmatpush1.msra.mxu0 0.0
  %196 = vmatprep.subr.mxu0 0.0
  %197 = vmatpush1.msra.mxu0 0.0
  %198 = vmatprep.subr.mxu0 0.0
  %199 = vmatpush1.msra.mxu0 0.0
  %200 = vmatprep.subr.mxu0 0.0
  %201 = vmatpush1.msra.mxu0 0.0
  %202 = vmatprep.subr.mxu0 0.0
  %203 = vmatpush1.msra.mxu0 0.0
  %204 = vmatprep.subr.mxu0 0.0
  %205 = vmatpush1.msra.mxu0 0.0
  %206 = vmatprep.subr.mxu0 0.0
  %207 = vmatpush1.msra.mxu0 0.0
  %208 = vmatprep.subr.mxu0 0.0
  %209 = vmatpush1.msra.mxu0 0.0
  %210 = vmatprep.subr.mxu0 0.0
  %211 = vmatpush1.msra.mxu0 0.0
  %212 = vmatprep.subr.mxu0 0.0
  %213 = vmatpush1.msra.mxu0 0.0
  %214 = vmatprep.subr.mxu0 0.0
  %215 = vmatpush1.msra.mxu0 0.0
  %216 = vmatprep.subr.mxu0 0.0
  %217 = vmatpush1.msra.mxu0 0.0
  %218 = vmatprep.subr.mxu0 0.0
  %219 = vmatpush1.msra.mxu0 0.0
  %220 = vmatprep.subr.mxu0 0.0
  %221 = vmatpush1.msra.mxu0 0.0
  %222 = vmatprep.subr.mxu0 0.0
  %223 = vmatpush1.msra.mxu0 0.0
  %224 = vmatprep.subr.mxu0 0.0
  %225 = vmatpush1.msra.mxu0 0.0
  %226 = vmatprep.mubr.f32.mxu0 0.0
  %227 = vmatmul.mubr.f32.gmra.mrb[0].mxu0 %v151
  %v228 = vpop.f32.mrb[0].mxu0
  %v229 = vadd.f32 %v132, %v228
  %v230 = vpop.f32.mrb[0].mxu0
  %231 = vmatprep.mubr.f32.mxu0 0.0
  %232 = vmatmul.mubr.f32.gmra.mrb[0].mxu0 %v154
  %v233 = vpop.f32.mrb[0].mxu0
  %v234 = vadd.f32 %v137, %v233
  %v235 = vpop.f32.mrb[0].mxu0
  %236 = vmatprep.mubr.f32.mxu0 0.0
  %237 = vmatmul.mubr.f32.gmra.mrb[0].mxu0 %v157
  %v238 = vpop.f32.mrb[0].mxu0
  %v239 = vadd.f32 %v142, %v238
  %v240 = vpop.f32.mrb[0].mxu0
  %241 = vmatprep.mubr.f32.mxu0 0.0
  %242 = vmatmul.mubr.f32.gmra.mrb[0].mxu0 %v160
  %v243 = vpop.f32.mrb[0].mxu0
  %v244 = vadd.f32 %v147, %v243
  %v245 = vpop.f32.mrb[0].mxu0
  %246 = vdwg.mxu0
  %v247 = vtanh.pop %v229
  %v248 = vtanh.pop %v234
  %v249 = vtanh.pop %v239
  %v250 = vtanh.pop %v244
  %s251 = scalar_lea.vmem %s3, 32
  %v252 = vld [vmem:[%s251] sm:$0xff]
  %v253 = vld [vmem:[%s251 + $0x8] sm:$0xff]
  %v254 = vld [vmem:[%s251 + $0x10] sm:$0xff]
  %v255 = vld [vmem:[%s251 + $0x18] sm:$0xff]
  %s256 = scalar_lea.vmem %s4, 32
  %v257 = vld [vmem:[%s256] sm:$0xff]
  %v258 = vld [vmem:[%s256 + $0x8] sm:$0xff]
  %v259 = vld [vmem:[%s256 + $0x10] sm:$0xff]
  %v260 = vld [vmem:[%s256 + $0x18] sm:$0xff]
  %262 = vset.pattern.permute.xlu0 0
  %263 = vperm.xlu0 %262, %v257
  %v264 = vpop.permute.xlu0 %263
  %267 = vset.pattern.permute.xlu0 0
  %268 = vperm.xlu0 %267, %v258
  %v269 = vpop.permute.xlu0 %268
  %272 = vset.pattern.permute.xlu0 0
  %273 = vperm.xlu0 %272, %v259
  %v274 = vpop.permute.xlu0 %273
  %277 = vset.pattern.permute.xlu0 0
  %278 = vperm.xlu0 %277, %v260
  %v279 = vpop.permute.xlu0 %278
  %v282 = vsel %vm149, %v252, 0
  %v285 = vsel %vm149, %v253, 0
  %v288 = vsel %vm149, %v254, 0
  %v291 = vsel %vm149, %v255, 0
  %293 = vmatprep.subr.mxu0 0.0
  %294 = vmatpush1.msra.mxu0 %v247
  %295 = vmatprep.subr.mxu0 0.0
  %296 = vmatpush1.msra.mxu0 %v248
  %297 = vmatprep.subr.mxu0 0.0
  %298 = vmatpush1.msra.mxu0 %v249
  %299 = vmatprep.subr.mxu0 0.0
  %300 = vmatpush1.msra.mxu0 %v250
  %301 = vmatprep.subr.mxu0 0.0
  %302 = vmatpush1.msra.mxu0 0.0
  %303 = vmatprep.subr.mxu0 0.0
  %304 = vmatpush1.msra.mxu0 0.0
  %305 = vmatprep.subr.mxu0 0.0
  %306 = vmatpush1.msra.mxu0 0.0
  %307 = vmatprep.subr.mxu0 0.0
  %308 = vmatpush1.msra.mxu0 0.0
  %309 = vmatprep.subr.mxu0 0.0
  %310 = vmatpush1.msra.mxu0 0.0
  %311 = vmatprep.subr.mxu0 0.0
  %312 = vmatpush1.msra.mxu0 0.0
  %313 = vmatprep.subr.mxu0 0.0
  %314 = vmatpush1.msra.mxu0 0.0
  %315 = vmatprep.subr.mxu0 0.0
  %316 = vmatpush1.msra.mxu0 0.0
  %317 = vmatprep.subr.mxu0 0.0
  %318 = vmatpush1.msra.mxu0 0.0
  %319 = vmatprep.subr.mxu0 0.0
  %320 = vmatpush1.msra.mxu0 0.0
  %321 = vmatprep.subr.mxu0 0.0
  %322 = vmatpush1.msra.mxu0 0.0
  %323 = vmatprep.subr.mxu0 0.0
  %324 = vmatpush1.msra.mxu0 0.0
  %325 = vmatprep.subr.mxu0 0.0
  %326 = vmatpush1.msra.mxu0 0.0
  %327 = vmatprep.subr.mxu0 0.0
  %328 = vmatpush1.msra.mxu0 0.0
  %329 = vmatprep.subr.mxu0 0.0
  %330 = vmatpush1.msra.mxu0 0.0
  %331 = vmatprep.subr.mxu0 0.0
  %332 = vmatpush1.msra.mxu0 0.0
  %333 = vmatprep.subr.mxu0 0.0
  %334 = vmatpush1.msra.mxu0 0.0
  %335 = vmatprep.subr.mxu0 0.0
  %336 = vmatpush1.msra.mxu0 0.0
  %337 = vmatprep.subr.mxu0 0.0
  %338 = vmatpush1.msra.mxu0 0.0
  %339 = vmatprep.subr.mxu0 0.0
  %340 = vmatpush1.msra.mxu0 0.0
  %341 = vmatprep.subr.mxu0 0.0
  %342 = vmatpush1.msra.mxu0 0.0
  %343 = vmatprep.subr.mxu0 0.0
  %344 = vmatpush1.msra.mxu0 0.0
  %345 = vmatprep.subr.mxu0 0.0
  %346 = vmatpush1.msra.mxu0 0.0
  %347 = vmatprep.subr.mxu0 0.0
  %348 = vmatpush1.msra.mxu0 0.0
  %349 = vmatprep.subr.mxu0 0.0
  %350 = vmatpush1.msra.mxu0 0.0
  %351 = vmatprep.subr.mxu0 0.0
  %352 = vmatpush1.msra.mxu0 0.0
  %353 = vmatprep.subr.mxu0 0.0
  %354 = vmatpush1.msra.mxu0 0.0
  %355 = vmatprep.subr.mxu0 0.0
  %356 = vmatpush1.msra.mxu0 0.0
  %357 = vmatprep.mubr.f32.mxu0 0.0
  %358 = vmatmul.mubr.f32.gmra.mrb[0].mxu0 %v282
  %v359 = vpop.f32.mrb[0].mxu0
  %v360 = vadd.f32 %v264, %v359
  %v361 = vpop.f32.mrb[0].mxu0
  %362 = vmatprep.mubr.f32.mxu0 0.0
  %363 = vmatmul.mubr.f32.gmra.mrb[0].mxu0 %v285
  %v364 = vpop.f32.mrb[0].mxu0
  %v365 = vadd.f32 %v269, %v364
  %v366 = vpop.f32.mrb[0].mxu0
  %367 = vmatprep.mubr.f32.mxu0 0.0
  %368 = vmatmul.mubr.f32.gmra.mrb[0].mxu0 %v288
  %v369 = vpop.f32.mrb[0].mxu0
  %v370 = vadd.f32 %v274, %v369
  %v371 = vpop.f32.mrb[0].mxu0
  %372 = vmatprep.mubr.f32.mxu0 0.0
  %373 = vmatmul.mubr.f32.gmra.mrb[0].mxu0 %v291
  %v374 = vpop.f32.mrb[0].mxu0
  %v375 = vadd.f32 %v279, %v374
  %v376 = vpop.f32.mrb[0].mxu0
  %377 = vdwg.mxu0
  %v378 = vtanh.pop %v360
  %v379 = vtanh.pop %v365
  %v380 = vtanh.pop %v370
  %v381 = vtanh.pop %v375
  %v382 = vld [vmem:[%s5] sm:$0xff]
  %v383 = vld [vmem:[%s5 + $0x8] sm:$0xff]
  %v384 = vld [vmem:[%s5 + $0x10] sm:$0xff]
  %v385 = vld [vmem:[%s5 + $0x18] sm:$0xff]
  %387 = vset.pattern.permute.xlu0 0
  %388 = vperm.xlu0 %387, %v382
  %v389 = vpop.permute.xlu0 %388
  %392 = vset.pattern.permute.xlu0 0
  %393 = vperm.xlu0 %392, %v383
  %v394 = vpop.permute.xlu0 %393
  %397 = vset.pattern.permute.xlu0 0
  %398 = vperm.xlu0 %397, %v384
  %v399 = vpop.permute.xlu0 %398
  %402 = vset.pattern.permute.xlu0 0
  %403 = vperm.xlu0 %402, %v385
  %v404 = vpop.permute.xlu0 %403
  %v406 = vmul.f32 %v389, %v378
  %v407 = vmul.f32 %v394, %v379
  %v408 = vmul.f32 %v399, %v380
  %v409 = vmul.f32 %v404, %v381
  %v410 = vadd.f32 %v406, %v407
  %v411 = vadd.f32 %v410, %v408
  %v412 = vadd.f32 %v411, %v409
  %v413 = vrot.slane %v412, 4
  %v414 = vadd.f32 %v412, %v413
  %v415 = vrot.slane %v414, 2
  %v416 = vadd.f32 %v414, %v415
  %v417 = vrot.slane %v416, 1
  %v418 = vadd.f32 %v416, %v417
  %v419 = vld [vmem:[#allocation2] sm:$0x1]
  %421 = vset.pattern.permute.xlu0 0
  %422 = vperm.xlu0 %421, %v419
  %v423 = vpop.permute.xlu0 %422
  %v425 = vlaneseq
  %v426 = vshrl.u32 %v425, 7
  %v427 = vsub.s32 0, %v426
  %v428 = vrot.slane %v423, %v427
  %v429 = vadd.f32 %v418, %v428
  %430 = vst [vmem:[%s7] sm:$0x1] %v429
  // Predicated region
  $region30: #{pinn_forward.1} parent=0 // pred_check
    _
  $region31: #{pinn_forward.1} parent=0 // pred_check_branch
    %432 = sbr.rel (0) target = $region33
  $region32: #{pinn_forward.1} parent=0 // pred_region
    _
  $region33: #{pinn_forward.1} parent=0 // pred_fallthru
    _
  // Predicated region
  $region34: #{pinn_forward.1} parent=0 // pred_check
    _
  $region35: #{pinn_forward.1} parent=0 // pred_check_branch
    %434 = sbr.rel (0) target = $region37
  $region36: #{pinn_forward.1} parent=0 // pred_region
    _
  $region37: #{pinn_forward.1} parent=0 // pred_fallthru
    _

</llo_original>
